<compile_context>
chip_gen: v5e
topology: v5e:2x2
jax: 0.10.0
libtpu: 0.0.40
codegen_flags: <defaults>
</compile_context>

<pallas_src>
import functools

import jax
import jax.numpy as jnp
from jax.experimental import pallas as pl
from jax.experimental.pallas import tpu as pltpu


_LANES = 128
_DEFAULT_BLOCK_BYTES = 4 * 1024 * 1024     # ~4 MiB per tile (good on v5e/v6e/v7x)
_VMEM_LIMIT_BYTES = 32 * 1024 * 1024       # double-buffered in+out tiles + headroom


def _sublane_multiple(dtype_bytes: int) -> int:
    # Sublane packing: 8 rows for 4-byte dtypes, 16 for 2-byte, 32 for 1-byte.
    return max(8, 32 // max(1, dtype_bytes))


def _drop_path_rows_kernel(x_ref, scale_ref, o_ref):
    # x_ref:     (1, TR, 128)  tile of sample b's flattened features (VMEM)
    # scale_ref: (B,) float32  per-sample scale = floor(keep_prob + u) / keep_prob (SMEM)
    # o_ref:     (1, TR, 128)
    b = pl.program_id(0)
    s = scale_ref[b]                                   # scalar read from SMEM
    o_ref[...] = (x_ref[...] * s).astype(o_ref.dtype)


def _drop_path_flat_kernel(x_ref, scale_ref, o_ref):
    # Fallback when F is not a multiple of 128.
    # x_ref: (B, TF), scale_ref: (B, 1) f32 resident across the grid, o_ref: (B, TF)
    o_ref[...] = (x_ref[...] * scale_ref[...]).astype(o_ref.dtype)


@functools.partial(jax.jit, static_argnames=("tr",), donate_argnums=(0,))
def _drop_path_rows_call(x3d, scale, *, tr):
    b, r, lanes = x3d.shape
    dtype_bytes = x3d.dtype.itemsize
    cost = pl.CostEstimate(
        flops=b * r * lanes,
        transcendentals=0,
        bytes_accessed=2 * b * r * lanes * dtype_bytes,
    )
    return pl.pallas_call(
        _drop_path_rows_kernel,
        out_shape=jax.ShapeDtypeStruct((b, r, lanes), x3d.dtype),
        grid_spec=pltpu.PrefetchScalarGridSpec(
            num_scalar_prefetch=0,
            grid=(b, pl.cdiv(r, tr)),
            in_specs=[
                pl.BlockSpec((1, tr, lanes), lambda i, j: (i, j, 0)),
                pl.BlockSpec(memory_space=pltpu.MemorySpace.SMEM),  # (B,) scales
            ],
            out_specs=pl.BlockSpec((1, tr, lanes), lambda i, j: (i, j, 0)),
        ),
        compiler_params=pltpu.CompilerParams(
            dimension_semantics=("parallel", "parallel"),
            vmem_limit_bytes=_VMEM_LIMIT_BYTES,
        ),
        cost_estimate=cost,
        input_output_aliases={0: 0},       # write in place (x3d is a donated temp)
    )(x3d, scale)


@functools.partial(jax.jit, static_argnames=("tf",), donate_argnums=(0,))
def _drop_path_flat_call(x2d, scale_col, *, tf):
    b, f = x2d.shape
    dtype_bytes = x2d.dtype.itemsize
    cost = pl.CostEstimate(
        flops=b * f,
        transcendentals=0,
        bytes_accessed=2 * b * f * dtype_bytes,
    )
    return pl.pallas_call(
        _drop_path_flat_kernel,
        out_shape=jax.ShapeDtypeStruct((b, f), x2d.dtype),
        grid_spec=pltpu.PrefetchScalarGridSpec(
            num_scalar_prefetch=0,
            grid=(pl.cdiv(f, tf),),        # ragged last block is masked on store
            in_specs=[
                pl.BlockSpec((b, tf), lambda j: (0, j)),
                pl.BlockSpec((b, 1), lambda j: (0, 0)),   # resident scale column
            ],
            out_specs=pl.BlockSpec((b, tf), lambda j: (0, j)),
        ),
        compiler_params=pltpu.CompilerParams(
            dimension_semantics=("parallel",),
            vmem_limit_bytes=_VMEM_LIMIT_BYTES,
        ),
        cost_estimate=cost,
        input_output_aliases={0: 0},
    )(x2d, scale_col)


def drop_path(x, drop_prob: float, *, training: bool, key,
              block_bytes: int = _DEFAULT_BLOCK_BYTES):
    """DropPath forward. x: (B, ...) e.g. NCHW. Returns same shape/dtype."""
    if drop_prob == 0.0 or not training:
        return x

    keep_prob = 1.0 - drop_prob
    b = int(x.shape[0])
    f = 1
    for d in x.shape[1:]:
        f *= int(d)
    dtype_bytes = jnp.dtype(x.dtype).itemsize

    # Hoisted per-sample mask/scale: one uniform draw per sample, mask computed in
    # x's dtype (matches torch.rand(..., dtype=x.dtype) + floor_()), scale in f32.
    rand = jax.random.uniform(key, (b,), dtype=x.dtype)
    mask = jnp.floor(keep_prob + rand)                       # 0.0 or 1.0 per sample
    scale = mask.astype(jnp.float32) * (1.0 / keep_prob)     # (B,) f32

    if f >= _LANES and f % _LANES == 0:
        # Primary path: lane-dense (B, R, 128) layout, one sample per leading grid step.
        r = f // _LANES
        sub = _sublane_multiple(dtype_bytes)
        target_rows = max(sub, block_bytes // (_LANES * dtype_bytes))
        tr = r if r <= target_rows else max(sub, (target_rows // sub) * sub)
        out = _drop_path_rows_call(x.reshape(b, r, _LANES), scale, tr=tr)
        return out.reshape(x.shape)

    # Fallback: F not a multiple of 128 — bounded lane tiles so we never build a
    # single (B, F) block that exceeds scoped VMEM (critical on v7x's 64 MiB).
    rows_padded = max(b, _sublane_multiple(dtype_bytes))     # VMEM sublane padding
    tf = (max(1, block_bytes // (rows_padded * dtype_bytes)) // _LANES) * _LANES
    if tf <= 0 or tf >= f:
        tf = f                                               # full extent: always legal
    out = _drop_path_flat_call(x.reshape(b, f), scale.reshape(b, 1), tf=tf)
    return out.reshape(x.shape)


class DropPath:
    """Pallas-backed DropPath module. drop_prob=None means identity (like the reference)."""

    def __init__(self, drop_prob=None):
        self.drop_prob = 0.0 if drop_prob is None else float(drop_prob)
        self.training = True

    def __call__(self, x, key):
        return drop_path(x, self.drop_prob, training=self.training, key=key)


if __name__ == "__main__":
    key = jax.random.PRNGKey(0)
    k_x, k_drop, k_x2 = jax.random.split(key, 3)

    # Small NCHW input consistent with the module's usage in a vision model.
    B, C, H, W = 2, 4, 16, 16
    x = jax.random.normal(k_x, (B, C, H, W), dtype=jnp.float32)

    drop_prob = 0.3
    module = DropPath(drop_prob)
    module.training = True

    out = jax.block_until_ready(module(x, k_drop))

    # --- correctness check against a pure-JAX reference (same RNG draw) ---
    keep_prob = 1.0 - drop_prob
    rand = jax.random.uniform(k_drop, (B,), dtype=x.dtype)
    mask = jnp.floor(keep_prob + rand).reshape(B, 1, 1, 1)
    ref = x / keep_prob * mask
    assert out.shape == x.shape and out.dtype == x.dtype
    assert jnp.allclose(out, ref, atol=1e-6, rtol=1e-5)

    # --- fallback path (feature dim not a multiple of 128): (B, S, D) tokens ---
    Bs, S, D = 2, 8, 33                                   # F = 264, not % 128
    x2 = jax.random.normal(k_x2, (Bs, S, D), dtype=jnp.float32)
    out2 = jax.block_until_ready(module(x2, k_drop))
    rand2 = jax.random.uniform(k_drop, (Bs,), dtype=x2.dtype)
    mask2 = jnp.floor(keep_prob + rand2).reshape(Bs, 1, 1)
    ref2 = x2 / keep_prob * mask2
    assert out2.shape == x2.shape and out2.dtype == x2.dtype
    assert jnp.allclose(out2, ref2, atol=1e-6, rtol=1e-5)

    # eval mode / drop_prob=0 -> identity
    module.training = False
    out_eval = jax.block_until_ready(module(x, k_drop))
    assert jnp.array_equal(out_eval, x)
    assert jnp.array_equal(jax.block_until_ready(DropPath(None)(x, k_drop)), x)

    print("KERNEL_OK")
</pallas_src>

<mosaic_0001>
module attributes {stable_mosaic.version = 11 : i64} {
  func.func @_drop_path_rows_kernel(%arg0: i32, %arg1: i32, %arg2: memref<1x8x128xf32, #tpu.memory_space<vmem>>, %arg3: memref<2xf32, #tpu.memory_space<smem>>, %arg4: memref<1x8x128xf32, #tpu.memory_space<vmem>>) attributes {dimension_semantics = [#tpu.dimension_semantics<parallel>, #tpu.dimension_semantics<parallel>], iteration_bounds = array<i64: 2, 1>, scalar_prefetch = 0 : i64, scratch_operands = 0 : i64, tpu.core_type = #tpu.core_type<tc>, window_params = [{transform_indices = @transform_0, window_bounds = array<i64: 1, 8, 128>}, {transform_indices = @transform_1, window_bounds = array<i64: 2>}, {transform_indices = @transform_2, window_bounds = array<i64: 1, 8, 128>}]} {
    %0 = arith.index_cast %arg0 : i32 to index
    %1 = memref.load %arg3[%0] : memref<2xf32, #tpu.memory_space<smem>>
    %c0 = arith.constant 0 : index
    %c0_0 = arith.constant 0 : index
    %c0_1 = arith.constant 0 : index
    %2 = vector.load %arg2[%c0, %c0_0, %c0_1] : memref<1x8x128xf32, #tpu.memory_space<vmem>>, vector<1x8x128xf32>
    %3 = vector.broadcast %1 : f32 to vector<1x8x128xf32>
    %4 = arith.mulf %2, %3 : vector<1x8x128xf32>
    %c0_2 = arith.constant 0 : index
    %c0_3 = arith.constant 0 : index
    %c0_4 = arith.constant 0 : index
    %5 = vector.load %arg4[%c0_2, %c0_3, %c0_4] : memref<1x8x128xf32, #tpu.memory_space<vmem>>, vector<1x8x128xf32>
    tpu.vector_store %arg4[%c0_2, %c0_3, %c0_4], %4 {strides = array<i32>} : memref<1x8x128xf32, #tpu.memory_space<vmem>>, vector<1x8x128xf32>,
    return
  }
  func.func @transform_0(%arg0: i32, %arg1: i32) -> (i32, i32, i32) {
    %c0_i32 = arith.constant 0 : i32
    %c0_i32_0 = arith.constant 0 : i32
    return %arg0, %arg1, %c0_i32 : i32, i32, i32
  }
  func.func @transform_1(%arg0: i32, %arg1: i32) -> i32 {
    %c0_i32 = arith.constant 0 : i32
    %c0_i32_0 = arith.constant 0 : i32
    return %c0_i32 : i32
  }
  func.func @transform_2(%arg0: i32, %arg1: i32) -> (i32, i32, i32) {
    %c0_i32 = arith.constant 0 : i32
    %c0_i32_0 = arith.constant 0 : i32
    return %arg0, %arg1, %c0_i32 : i32, i32, i32
  }
}

</mosaic_0001>

<llo_original>
// kernel: _drop_path_rows_call.1
$region0: #{_drop_path_rows_call.1}
  #allocation0 [shape = 'u32[]', space=smem, size = 0x4, offset = 0x4, fixed_abs, tag = 'smem constant byte address 0x4 - core index']
  #allocation1 [shape = 'u32[72,128]{1,0:T(1,128)}', space=vmem, size = 0x9000, scoped, tag = 'internal scratch']
  %s0 = inlined_call_operand.hbm [shape: f32[2,8,128], index: 0, kind: input, shape index: {}, may-alias: {0,2}]
  %s1 = inlined_call_operand.hbm [shape: f32[2], index: 1, kind: input, shape index: {}]
  %s2 = inlined_call_operand.hbm [shape: f32[2,8,128], index: 2, kind: output, shape index: {}, may-alias: {0,2}]
  %s3 = sld [smem:[#allocation0]]
  $region49: #{_drop_path_rows_call.1} parent=0
    _
  %s5 = ssub.s32 1, %s3
  %s6 = scalar_select 0, %s5, %s3
  $region1: #{_drop_path_rows_call.1} parent=0
    #allocation2 [shape = 'u8[8192]{0}', space=vmem, size = 0x2000, scoped, tag = 'input window, operand 0']
    #allocation3 [shape = 's32[2]{0}', space=sflag, size = 0x8, scoped, tag = 'scoped memory for _drop_path_rows_call.1']
    #allocation4 [shape = 's32[2]{0}', space=sflag, size = 0x8, scoped, tag = 'scoped memory for _drop_path_rows_call.1']
    #allocation5 [shape = 's32[2]{0}', space=sflag, size = 0x8, scoped, tag = 'scoped memory for _drop_path_rows_call.1']
    #allocation6 [shape = 'u8[512]{0}', space=smem, size = 0x200, scoped, tag = 'input window, operand 1, single buffered']
    #allocation7 [shape = 'u8[8192]{0}', space=vmem, size = 0x2000, scoped, tag = 'output window, operand 0']
    %7 = vsyncpa [#allocation3], 0
    %s8 = scalar_lea.sflag [#allocation3], 1
    %9 = vsyncpa %s8, 0
    %10 = vsyncpa [#allocation5], 0
    %11 = vsyncpa [#allocation4], 0
    %s12 = scalar_lea.sflag [#allocation4], 1
    %13 = vsyncpa %s12, 0
    loop: start=0, step=1, limit=4
    $region2: #{_drop_path_rows_call.1} parent=1 // loop_pre_header
      _
    $region3: #{_drop_path_rows_call.1} parent=1 // loop_header
      %s15 = sphi 0, %s19
      %p16 = scmp.ge.s32.totalorder %s15, 4
      %s22 = sphi 0, %s34
      %s23 = sphi 0, %s30
      %s24 = sphi 0, %s22
      %s25 = sphi 0, %s23
      %s26 = sphi 0, %s24
      %s27 = sphi 0, %s25
      %s39 = sphi 0, %s41
      %s42 = sphi 0, %s39
      %s43 = sphi 0, %s42
      %s59 = sphi 0, %s43
      %s63 = sphi 0, %s63
      %s65 = sphi 0, %s63
      %s66 = sphi 0, %s65
      %s80 = sphi 0, %s66
      %s88 = sphi 0, %s90
      %s91 = sphi 0, %s88
      %s92 = sphi 0, %s91
      %s108 = sphi 0, %s92
    $region4: #{_drop_path_rows_call.1} parent=1 // loop_header_branch
      %18 = sbr.rel (%p16) target = $region8
    $region5: #{_drop_path_rows_call.1} parent=1 // loop_body
      %s20 = ssub.s32 %s15, 1
      %s21 = ssub.s32 %s15, 2
      %s28 = sadd.s32 1, %s23
      %p29 = scmp.ge.s32.totalorder %s28, 1
      %s30 = scalar_select %p29, 0, %s28
      %s31 = sadd.s32 1, %s22
      %s32 = scalar_select %p29, %s31, %s22
      %p33 = scmp.ge.s32.totalorder %s32, 2
      %s34 = scalar_select %p33, 0, %s32
      %s35 = ssub.s32 %s22, %s34
      %s36 = ssub.s32 %s23, %s30
      %s37 = sor.u32 %s35, %s36
      %p38 = scmp.eq.s32.totalorder %s37, 0
      %s40 = sadd.s32 %s39, 1
      %s41 = scalar_select %p38, %s39, %s40
      %p44 = pneg %p38
      %p45 = scmp.eq.s32.totalorder %s15, 1
      %p46 = por %p44, %p45
      %p47 = scmp.ne.s32.totalorder %s39, %s42
      %p48 = scmp.eq.s32.totalorder %s15, 0
      %p49 = por %p47, %p48
      %p50 = scmp.ne.s32.totalorder %s39, %s42
      %p51 = scmp.eq.s32.totalorder %s20, 1
      %p52 = por %p50, %p51
      %p53 = scmp.ne.s32.totalorder %s42, %s43
      %p54 = scmp.eq.s32.totalorder %s20, 0
      %p55 = por %p53, %p54
      %p56 = scmp.ne.s32.totalorder %s42, %s43
      %p57 = scmp.eq.s32.totalorder %s21, 1
      %p58 = por %p56, %p57
      %p60 = scmp.ne.s32.totalorder %s43, %s59
      %p61 = scmp.eq.s32.totalorder %s21, 0
      %p62 = por %p60, %p61
      %s64 = sadd.s32 %s63, 1
      %p67 = scmp.eq.s32.totalorder %s15, 1
      %p68 = scmp.ne.s32.totalorder %s63, %s65
      %p69 = scmp.eq.s32.totalorder %s15, 0
      %p70 = por %p68, %p69
      %p71 = scmp.ne.s32.totalorder %s63, %s65
      %p72 = scmp.eq.s32.totalorder %s20, 1
      %p73 = por %p71, %p72
      %p74 = scmp.ne.s32.totalorder %s65, %s66
      %p75 = scmp.eq.s32.totalorder %s20, 0
      %p76 = por %p74, %p75
      %p77 = scmp.ne.s32.totalorder %s65, %s66
      %p78 = scmp.eq.s32.totalorder %s21, 1
      %p79 = por %p77, %p78
      %p81 = scmp.ne.s32.totalorder %s66, %s80
      %p82 = scmp.eq.s32.totalorder %s21, 0
      %p83 = por %p81, %p82
      %s84 = ssub.s32 %s22, %s34
      %s85 = ssub.s32 %s23, %s30
      %s86 = sor.u32 %s84, %s85
      %p87 = scmp.eq.s32.totalorder %s86, 0
      %s89 = sadd.s32 %s88, 1
      %s90 = scalar_select %p87, %s88, %s89
      %p93 = pneg %p87
      %p94 = scmp.eq.s32.totalorder %s15, 1
      %p95 = por %p93, %p94
      %p96 = scmp.ne.s32.totalorder %s88, %s91
      %p97 = scmp.eq.s32.totalorder %s15, 0
      %p98 = por %p96, %p97
      %p99 = scmp.ne.s32.totalorder %s88, %s91
      %p100 = scmp.eq.s32.totalorder %s20, 1
      %p101 = por %p99, %p100
      %p102 = scmp.ne.s32.totalorder %s91, %s92
      %p103 = scmp.eq.s32.totalorder %s20, 0
      %p104 = por %p102, %p103
      %p105 = scmp.ne.s32.totalorder %s91, %s92
      %p106 = scmp.eq.s32.totalorder %s21, 1
      %p107 = por %p105, %p106
      %p109 = scmp.ne.s32.totalorder %s92, %s108
      %p110 = scmp.eq.s32.totalorder %s21, 0
      %p111 = por %p109, %p110
      %p112 = scmp.le.s32.totalorder 1, %s15
      %p113 = scmp.lt.s32.totalorder %s15, 3
      %p114 = pnand %p112, %p113
      %p115 = pneg %p114
      // Predicated region
      $region9: #{_drop_path_rows_call.1} parent=5 // pred_check
        _
      $region10: #{_drop_path_rows_call.1} parent=5 // pred_check_branch
        %117 = sbr.rel (%p114) target = $region12
      $region11: #{_drop_path_rows_call.1} parent=5 // pred_region
        %s118 = ssub.s32 %s15, 1
        // Predicated region
        $region13: #{_drop_path_rows_call.1} parent=11 // pred_check
          %p119 = pneg %p76
        $region14: #{_drop_path_rows_call.1} parent=11 // pred_check_branch
          %121 = sbr.rel (%p119) target = $region16
        $region15: #{_drop_path_rows_call.1} parent=11 // pred_region
          %123 = vsyncadd [#allocation5], 0
          %s125 = sshll.u32 %s1, 4
          %s126 = int_to_ptr.hbm [resolvable:$true] %s125
          %128 = dma.hbm_to_smem %s126, 16, [#allocation6], [#allocation5]
        $region16: #{_drop_path_rows_call.1} parent=11 // pred_fallthru
          _
      $region12: #{_drop_path_rows_call.1} parent=5 // pred_fallthru
        _
      %p129 = scmp.lt.s32.totalorder %s15, 2
      // Predicated region
      $region17: #{_drop_path_rows_call.1} parent=5 // pred_check
        %p130 = pneg %p129
      $region18: #{_drop_path_rows_call.1} parent=5 // pred_check_branch
        %132 = sbr.rel (%p130) target = $region20
      $region19: #{_drop_path_rows_call.1} parent=5 // pred_region
        // Predicated region
        $region21: #{_drop_path_rows_call.1} parent=19 // pred_check
          %p133 = pneg %p49
        $region22: #{_drop_path_rows_call.1} parent=19 // pred_check_branch
          %135 = sbr.rel (%p133) target = $region24
        $region23: #{_drop_path_rows_call.1} parent=19 // pred_region
          %s136 = sand.u32 %s39, 1
          %s137 = scalar_lea.sflag [#allocation3], %s136
          %s138 = sand.u32 %s39, 1
          %s139 = smul.addr %s138, 8
          %s140 = scalar_lea.vmem [#allocation2], %s139
          %142 = vsyncadd %s137, 0
          %s143 = sadd.s32 %s23, %s22
          %s144 = smul.addr %s143, 8
          %s145 = scalar_lea.hbm %s0, %s144
          %s147 = sshll.u32 %s145, 4
          %s148 = int_to_ptr.hbm [resolvable:$true] %s147
          %s149 = sshll.u32 %s140, 4
          %s150 = int_to_ptr.vmem [resolvable:$true] %s149
          %152 = dma.hbm_to_vmem [thread:$0]  %s148, 128, %s150, %s137
        $region24: #{_drop_path_rows_call.1} parent=19 // pred_fallthru
          _
      $region20: #{_drop_path_rows_call.1} parent=5 // pred_fallthru
        _
      %p153 = scmp.le.s32.totalorder 1, %s15
      %p154 = scmp.lt.s32.totalorder %s15, 3
      %p155 = pnand %p153, %p154
      %p156 = pneg %p155
      // Predicated region
      $region25: #{_drop_path_rows_call.1} parent=5 // pred_check
        _
      $region26: #{_drop_path_rows_call.1} parent=5 // pred_check_branch
        %158 = sbr.rel (%p155) target = $region28
      $region27: #{_drop_path_rows_call.1} parent=5 // pred_region
        %s159 = ssub.s32 %s15, 1
        %s160 = sand.u32 %s42, 1
        %s161 = scalar_lea.sflag [#allocation3], %s160
        %s162 = sand.u32 %s42, 1
        %s163 = smul.addr %s162, 8
        %s164 = scalar_lea.vmem [#allocation2], %s163
        // Predicated region
        $region29: #{_drop_path_rows_call.1} parent=27 // pred_check
          %p165 = pneg %p55
        $region30: #{_drop_path_rows_call.1} parent=27 // pred_check_branch
          %167 = sbr.rel (%p165) target = $region32
        $region31: #{_drop_path_rows_call.1} parent=27 // pred_region
          %169 = dma.done %s161, 128
        $region32: #{_drop_path_rows_call.1} parent=27 // pred_fallthru
          _
        // Predicated region
        $region33: #{_drop_path_rows_call.1} parent=27 // pred_check
          %p170 = pneg %p76
        $region34: #{_drop_path_rows_call.1} parent=27 // pred_check_branch
          %172 = sbr.rel (%p170) target = $region36
        $region35: #{_drop_path_rows_call.1} parent=27 // pred_region
          %174 = dma.done [#allocation5], 16
        $region36: #{_drop_path_rows_call.1} parent=27 // pred_fallthru
          _
        %175 = sfence
        %s176 = sand.u32 %s42, 1
        %s177 = scalar_lea.sflag [#allocation3], %s176
        %s178 = sand.u32 %s42, 1
        %s179 = smul.addr %s178, 8
        %s180 = scalar_lea.vmem [#allocation2], %s179
        %p181 = pneg %p55
        %p182 = pneg %p52
        %p183 = pneg %p76
        %p184 = pneg %p73
        %p185 = pneg %p104
        %p186 = pneg %p101
        %s187 = sand.u32 %s91, 1
        %s188 = scalar_lea.sflag [#allocation4], %s187
        %s189 = sand.u32 %s91, 1
        %s190 = smul.addr %s189, 8
        %s191 = scalar_lea.vmem [#allocation7], %s190
        %s192 = sld [smem:[#allocation6 + %s24]]
        %v193 = vld [vmem:[%s164] sm:$0xff]
        %v194 = vstv %s192
        %v195 = vmul.f32 %v193, %v194
        %196 = vst [vmem:[%s191] sm:$0xff] %v195
        %s197 = sand.u32 %s91, 1
        %s198 = scalar_lea.sflag [#allocation4], %s197
        %s199 = sand.u32 %s91, 1
        %s200 = smul.addr %s199, 8
        %s201 = scalar_lea.vmem [#allocation7], %s200
        // Predicated region
        $region37: #{_drop_path_rows_call.1} parent=27 // pred_check
          %p202 = pneg %p101
        $region38: #{_drop_path_rows_call.1} parent=27 // pred_check_branch
          %204 = sbr.rel (%p202) target = $region40
        $region39: #{_drop_path_rows_call.1} parent=27 // pred_region
          %206 = vsyncadd %s198, 0
          %s207 = sadd.s32 %s25, %s24
          %s208 = smul.addr %s207, 8
          %s209 = scalar_lea.hbm %s2, %s208
          %s211 = sshll.u32 %s201, 4
          %s212 = int_to_ptr.vmem [resolvable:$true] %s211
          %s213 = sshll.u32 %s209, 4
          %s214 = int_to_ptr.hbm [resolvable:$true] %s213
          %216 = dma.vmem_to_hbm [thread:$0]  %s212, 128, %s214, %s198
        $region40: #{_drop_path_rows_call.1} parent=27 // pred_fallthru
          _
      $region28: #{_drop_path_rows_call.1} parent=5 // pred_fallthru
        _
      %p217 = scmp.le.s32.totalorder 2, %s15
      // Predicated region
      $region41: #{_drop_path_rows_call.1} parent=5 // pred_check
        %p218 = pneg %p217
      $region42: #{_drop_path_rows_call.1} parent=5 // pred_check_branch
        %220 = sbr.rel (%p218) target = $region44
      $region43: #{_drop_path_rows_call.1} parent=5 // pred_region
        %s221 = ssub.s32 %s15, 2
        // Predicated region
        $region45: #{_drop_path_rows_call.1} parent=43 // pred_check
          %p222 = pneg %p107
        $region46: #{_drop_path_rows_call.1} parent=43 // pred_check_branch
          %224 = sbr.rel (%p222) target = $region48
        $region47: #{_drop_path_rows_call.1} parent=43 // pred_region
          %s225 = sand.u32 %s92, 1
          %s226 = scalar_lea.sflag [#allocation4], %s225
          %s227 = sand.u32 %s92, 1
          %s228 = smul.addr %s227, 8
          %s229 = scalar_lea.vmem [#allocation7], %s228
          %231 = dma.done %s226, 128
        $region48: #{_drop_path_rows_call.1} parent=43 // pred_fallthru
          _
      $region44: #{_drop_path_rows_call.1} parent=5 // pred_fallthru
        _
    $region6: #{_drop_path_rows_call.1} parent=1 // loop_footer
      %s19 = sadd.s32 1, %s15
    $region7: #{_drop_path_rows_call.1} parent=1 // loop_footer_branch
      %14 = sbr.rel target = $region3
    $region8: #{_drop_path_rows_call.1} parent=1 // loop_exit
      _
    %232 = vsyncpa [#allocation3], 1
    %s233 = scalar_lea.sflag [#allocation3], 1
    %234 = vsyncpa %s233, 1
    %235 = vsyncpa [#allocation4], 1
    %s236 = scalar_lea.sflag [#allocation4], 1
    %237 = vsyncpa %s236, 1
    %238 = vsyncpa [#allocation5], 1
    %s239 = scalar_lea.sflag [#allocation5], 1
    %240 = vsyncpa %s239, 1

</llo_original>
